<compile_context>
chip_gen: v7x
topology: tpu7x:2x2x1
jax: 0.10.0
libtpu: 0.0.40
codegen_flags: <defaults>
</compile_context>

<pallas_src>
import jax
import jax.numpy as jnp
from jax import lax
from jax.experimental import pallas as pl
from jax.experimental.pallas import tpu as pltpu

VMEM_SPEC = pl.BlockSpec(memory_space=pltpu.MemorySpace.VMEM)


def _round_up(x, m):
    return (x + m - 1) // m * m


def _num_batch_blocks(B):
    # v7x megacore: shard the batch-independent recurrence across both TCs when
    # the per-core block still satisfies bf16 (16, 128) sublane tiling.
    # No-op (single block) on v5e / v6e sized batches or when B % 32 != 0.
    return 2 if (B % 32 == 0) else 1


# ----------------------------------------------------------------------------
# Kernels
# ----------------------------------------------------------------------------
def _input_proj_kernel(x_ref, we_ref, be_ref, wd_ref, bd_ref, oe_ref, od_ref):
    """Fused encoder+decoder input projections (hoisted out of the RNN loop).

    x_ref: [tile, E] bf16 (embeddings, flattened time-major rows)
    we/wd: [E, H] bf16   be/bd: [1, H] f32 (folded b_ih + b_hh)
    oe/od: [tile, H] bf16 (largest intermediate -> bf16 stream)
    """
    x = x_ref[...]
    oe_ref[...] = (jnp.dot(x, we_ref[...], preferred_element_type=jnp.float32)
                   + be_ref[...]).astype(oe_ref.dtype)
    od_ref[...] = (jnp.dot(x, wd_ref[...], preferred_element_type=jnp.float32)
                   + bd_ref[...]).astype(od_ref.dtype)


def _enc_rnn_kernel(xproj_ref, len_ref, w_hh_ref, hlast_ref, h_scr):
    """Elman RNN (tanh) recurrence, encoder variant.

    Gridded over (batch_blocks, time_blocks); the hidden state carry lives in
    the persistent VMEM scratch h_scr.  Only the hidden state at each
    sequence's last valid step is emitted (no trajectory output).

    xproj_ref: [Tc, Bc, H] bf16 (precomputed x@W_ih + b, time chunk)
    len_ref:   [Bc, 1] int32 sorted lengths
    w_hh_ref:  [H, H] bf16     hlast_ref: [Bc, H] f32   h_scr: VMEM [Bc, H] f32
    """
    t_chunk = xproj_ref.shape[0]
    t_blk = pl.program_id(1)

    @pl.when(t_blk == 0)
    def _():
        h_scr[...] = jnp.zeros_like(h_scr)     # encoder h0 == 0

    w_hh = w_hh_ref[...]                       # hoist invariant bf16 load
    lengths = len_ref[...]                     # [Bc, 1] int32
    t_base = t_blk * t_chunk

    def body(i, carry):
        h_prev = h_scr[...]
        h_new = jnp.tanh(
            jnp.dot(h_prev.astype(jnp.bfloat16), w_hh,
                    preferred_element_type=jnp.float32)
            + xproj_ref[i].astype(jnp.float32))
        valid = (t_base + i) < lengths                    # [Bc, 1]
        h_scr[...] = jnp.where(valid, h_new, h_prev)      # freeze at last valid
        return carry

    lax.fori_loop(0, t_chunk, body, 0, unroll=True)
    hlast_ref[...] = h_scr[...]                # same block across time -> resident


def _dec_rnn_kernel(xproj_ref, len_ref, w_hh_ref, h0_ref, out_ref, h_scr):
    """Decoder variant: emits the bf16 trajectory, zero-padded beyond each
    sequence's length (pad_packed_sequence semantics)."""
    t_chunk = xproj_ref.shape[0]
    t_blk = pl.program_id(1)

    @pl.when(t_blk == 0)
    def _():
        h_scr[...] = h0_ref[...]

    w_hh = w_hh_ref[...]
    lengths = len_ref[...]
    t_base = t_blk * t_chunk

    def body(i, carry):
        h_prev = h_scr[...]
        h_new = jnp.tanh(
            jnp.dot(h_prev.astype(jnp.bfloat16), w_hh,
                    preferred_element_type=jnp.float32)
            + xproj_ref[i].astype(jnp.float32))
        valid = (t_base + i) < lengths
        h_scr[...] = jnp.where(valid, h_new, h_prev)
        out_ref[i] = jnp.where(valid, h_new, 0.0).astype(out_ref.dtype)
        return carry

    lax.fori_loop(0, t_chunk, body, 0, unroll=True)


def _latent_dense_kernel(h_ref, wm_ref, bm_ref, wv_ref, bv_ref, eps_ref,
                         wl2h_ref, bl2h_ref,
                         mean_ref, logv_ref, z_ref, hdec_ref):
    """Fused hidden2mean / hidden2logv / reparameterization / latent2hidden."""
    h = h_ref[...]
    mean = jnp.dot(h, wm_ref[...], preferred_element_type=jnp.float32) + bm_ref[...]
    logv = jnp.dot(h, wv_ref[...], preferred_element_type=jnp.float32) + bv_ref[...]
    z = eps_ref[...] * jnp.exp(0.5 * logv) + mean
    mean_ref[...] = mean
    logv_ref[...] = logv
    z_ref[...] = z
    hdec_ref[...] = (jnp.dot(z, wl2h_ref[...], preferred_element_type=jnp.float32)
                     + bl2h_ref[...])


def _proj_logsoftmax_kernel(x_ref, w_ref, b_ref, o_ref):
    """o = log_softmax(x @ W + b, axis=-1).  bf16 MXU operands, fp32 math."""
    logits = jnp.dot(x_ref[...], w_ref[...],
                     preferred_element_type=jnp.float32) + b_ref[...]
    m = jnp.max(logits, axis=-1, keepdims=True)
    s = logits - m
    lse = jnp.log(jnp.sum(jnp.exp(s), axis=-1, keepdims=True))
    o_ref[...] = s - lse


# ----------------------------------------------------------------------------
# Pallas wrappers
# ----------------------------------------------------------------------------
def run_input_proj(x_bf16, w_enc, b_enc, w_dec, b_dec, *, row_tile=512):
    """Row-tiled fused input projection. x is the flattened [S*B, E] embedding."""
    rows, E = x_bf16.shape
    H = w_enc.shape[1]
    tile = min(row_tile, _round_up(rows, 8))
    padded = _round_up(rows, tile)
    if padded != rows:
        x_bf16 = jnp.pad(x_bf16, ((0, padded - rows), (0, 0)))
    oe, od = pl.pallas_call(
        _input_proj_kernel,
        out_shape=(jax.ShapeDtypeStruct((padded, H), jnp.bfloat16),
                   jax.ShapeDtypeStruct((padded, H), jnp.bfloat16)),
        grid=(padded // tile,),
        in_specs=[pl.BlockSpec((tile, E), lambda i: (i, 0)),
                  pl.BlockSpec((E, H), lambda i: (0, 0)),
                  pl.BlockSpec((1, H), lambda i: (0, 0)),
                  pl.BlockSpec((E, H), lambda i: (0, 0)),
                  pl.BlockSpec((1, H), lambda i: (0, 0))],
        out_specs=(pl.BlockSpec((tile, H), lambda i: (i, 0)),
                   pl.BlockSpec((tile, H), lambda i: (i, 0))),
        compiler_params=pltpu.CompilerParams(dimension_semantics=("parallel",)),
    )(x_bf16, w_enc, b_enc, w_dec, b_dec)
    return oe[:rows], od[:rows]


def run_encoder_rnn(xproj_sbh, lengths_b1, w_hh_bf16, *, t_chunk=8):
    """Time-chunked, batch-parallel encoder recurrence; returns [B, H] f32."""
    S, B, H = xproj_sbh.shape
    S_pad = _round_up(S, t_chunk)
    if S_pad != S:
        xproj_sbh = jnp.pad(xproj_sbh, ((0, S_pad - S), (0, 0), (0, 0)))
    n_b = _num_batch_blocks(B)
    Bc = B // n_b
    return pl.pallas_call(
        _enc_rnn_kernel,
        out_shape=jax.ShapeDtypeStruct((B, H), jnp.float32),
        grid=(n_b, S_pad // t_chunk),
        in_specs=[pl.BlockSpec((t_chunk, Bc, H), lambda b, t: (t, b, 0)),
                  pl.BlockSpec((Bc, 1), lambda b, t: (b, 0)),
                  pl.BlockSpec((H, H), lambda b, t: (0, 0))],
        out_specs=pl.BlockSpec((Bc, H), lambda b, t: (b, 0)),
        scratch_shapes=[pltpu.VMEM((Bc, H), jnp.float32)],
        compiler_params=pltpu.CompilerParams(
            dimension_semantics=("parallel", "arbitrary")),
    )(xproj_sbh, lengths_b1, w_hh_bf16)


def run_decoder_rnn(xproj_sbh, lengths_b1, w_hh_bf16, h0, *, t_chunk=8):
    """Time-chunked, batch-parallel decoder recurrence; returns [S, B, H] bf16."""
    S, B, H = xproj_sbh.shape
    S_pad = _round_up(S, t_chunk)
    if S_pad != S:
        xproj_sbh = jnp.pad(xproj_sbh, ((0, S_pad - S), (0, 0), (0, 0)))
    n_b = _num_batch_blocks(B)
    Bc = B // n_b
    out = pl.pallas_call(
        _dec_rnn_kernel,
        out_shape=jax.ShapeDtypeStruct((S_pad, B, H), jnp.bfloat16),
        grid=(n_b, S_pad // t_chunk),
        in_specs=[pl.BlockSpec((t_chunk, Bc, H), lambda b, t: (t, b, 0)),
                  pl.BlockSpec((Bc, 1), lambda b, t: (b, 0)),
                  pl.BlockSpec((H, H), lambda b, t: (0, 0)),
                  pl.BlockSpec((Bc, H), lambda b, t: (b, 0))],
        out_specs=pl.BlockSpec((t_chunk, Bc, H), lambda b, t: (t, b, 0)),
        scratch_shapes=[pltpu.VMEM((Bc, H), jnp.float32)],
        compiler_params=pltpu.CompilerParams(
            dimension_semantics=("parallel", "arbitrary")),
    )(xproj_sbh, lengths_b1, w_hh_bf16, h0)
    return out[:S]


def run_latent_dense(h_enc, wm_t, bm, wv_t, bv, eps, wl2h_t, bl2h):
    B, H = h_enc.shape
    L = wm_t.shape[1]
    return pl.pallas_call(
        _latent_dense_kernel,
        out_shape=(jax.ShapeDtypeStruct((B, L), jnp.float32),
                   jax.ShapeDtypeStruct((B, L), jnp.float32),
                   jax.ShapeDtypeStruct((B, L), jnp.float32),
                   jax.ShapeDtypeStruct((B, H), jnp.float32)),
        in_specs=[VMEM_SPEC] * 8,
        out_specs=(VMEM_SPEC,) * 4,
    )(h_enc, wm_t, bm, wv_t, bv, eps, wl2h_t, bl2h)


def run_proj_logsoftmax(x_bf16, w_bf16, b_f32, *, vmem_budget_bytes=48 << 20):
    """Row-tiled vocab projection + log_softmax.  W resident, rows "parallel".

    The row tile is derived from an explicit VMEM budget (resident weight +
    double-buffered input/output blocks) and the scoped VMEM limit is set
    explicitly, since the default 16/32 MiB limits do not cover a resident
    [H, V] bf16 weight at realistic vocab sizes.
    """
    rows, H = x_bf16.shape
    V = w_bf16.shape[1]
    # Conservatively count the constant-index weight/bias as double-buffered.
    fixed = 2 * H * V * 2 + 2 * V * 4 + (4 << 20)       # + compiler slack
    per_row = 2 * V * 4 + 2 * H * 2                     # dbl-buf f32 out + bf16 in
    avail = max(vmem_budget_bytes - fixed, 8 * per_row)
    tile = int(max(8, min(512, (avail // per_row) // 8 * 8, _round_up(rows, 8))))
    padded = _round_up(rows, tile)
    if padded != rows:
        x_bf16 = jnp.pad(x_bf16, ((0, padded - rows), (0, 0)))
    vmem_limit = int(max(16 << 20, min(fixed + tile * per_row, 96 << 20)))
    # TODO(synk): for very large vocabularies on v7x (64 MiB VMEM) tile V with a
    # two-pass / online logsumexp instead of keeping the full [H, V] weight and
    # [tile, V] output resident per block.
    # TODO(synk): emit bf16 logp (or fuse the NLL gather/reduction) if the
    # consumer tolerates it -- halves/removes the dominant HBM writeback.
    out = pl.pallas_call(
        _proj_logsoftmax_kernel,
        out_shape=jax.ShapeDtypeStruct((padded, V), jnp.float32),
        grid=(padded // tile,),
        in_specs=[pl.BlockSpec((tile, H), lambda i: (i, 0)),
                  pl.BlockSpec((H, V), lambda i: (0, 0)),
                  pl.BlockSpec((1, V), lambda i: (0, 0))],
        out_specs=pl.BlockSpec((tile, V), lambda i: (i, 0)),
        compiler_params=pltpu.CompilerParams(
            dimension_semantics=("parallel",),
            vmem_limit_bytes=vmem_limit),
    )(x_bf16, w_bf16, b_f32)
    return out[:rows]


# ----------------------------------------------------------------------------
# Parameters (deterministic, shapes follow nn.Module __init__)
# ----------------------------------------------------------------------------
def init_params(key, vocab_size, embedding_size, hidden_size, latent_size):
    ks = jax.random.split(key, 13)

    def w(k, shape, scale=0.1):
        return (scale * jax.random.normal(k, shape)).astype(jnp.float32)

    return dict(
        # Embedding stored in bf16: the gather moves half the bytes and the
        # input projection consumes bf16 anyway.
        embedding=w(ks[0], (vocab_size, embedding_size)).astype(jnp.bfloat16),
        enc_w_ih=w(ks[1], (hidden_size, embedding_size)),
        enc_w_hh=w(ks[2], (hidden_size, hidden_size)),
        enc_b_ih=w(ks[3], (hidden_size,)),
        enc_b_hh=w(ks[4], (hidden_size,)),
        dec_w_ih=w(ks[5], (hidden_size, embedding_size)),
        dec_w_hh=w(ks[6], (hidden_size, hidden_size)),
        dec_b_ih=w(ks[7], (hidden_size,)),
        dec_b_hh=w(ks[8], (hidden_size,)),
        h2m_w=w(ks[9], (latent_size, hidden_size)),
        h2m_b=jnp.zeros((latent_size,), jnp.float32),
        h2v_w=w(ks[10], (latent_size, hidden_size)),
        h2v_b=jnp.zeros((latent_size,), jnp.float32),
        l2h_w=w(ks[11], (hidden_size, latent_size)),
        l2h_b=jnp.zeros((hidden_size,), jnp.float32),
        o2v_w=w(ks[12], (vocab_size, hidden_size)),
        o2v_b=jnp.zeros((vocab_size,), jnp.float32),
    )


# ----------------------------------------------------------------------------
# Forward pass (mirrors SentenceVAE.forward)
# ----------------------------------------------------------------------------
def sentence_vae_forward(params, input_sequence, length, eps):
    B, S = input_sequence.shape
    V, E = params["embedding"].shape
    H = params["enc_w_hh"].shape[0]
    L = params["h2m_w"].shape[0]

    # torch.sort(length, descending=True)
    sorted_idx = jnp.argsort(-length)
    sorted_lengths = length[sorted_idx]
    seq_sorted = input_sequence[sorted_idx]                          # [B, S]

    # Time-major embedding gather (bf16 table; avoids a [B,S,E]->[S,B,E] transpose
    # of a float tensor and a separate cast pass).
    emb_sbe = jnp.take(params["embedding"], seq_sorted.T, axis=0)    # [S, B, E] bf16
    emb_flat = emb_sbe.reshape(S * B, E)                             # [S*B, E]

    # Fused encoder+decoder input projections, hoisted out of the time loop.
    enc_b = (params["enc_b_ih"] + params["enc_b_hh"]).reshape(1, H)
    dec_b = (params["dec_b_ih"] + params["dec_b_hh"]).reshape(1, H)
    xproj_enc, xproj_dec = run_input_proj(
        emb_flat,
        params["enc_w_ih"].T.astype(jnp.bfloat16), enc_b,
        params["dec_w_ih"].T.astype(jnp.bfloat16), dec_b)
    xproj_enc = xproj_enc.reshape(S, B, H)                           # bf16
    xproj_dec = xproj_dec.reshape(S, B, H)                           # bf16

    # pack_padded_sequence semantics: validity is computed in-kernel from the
    # sorted lengths (no [S,B,1] mask stream).
    lengths_b1 = sorted_lengths.reshape(B, 1).astype(jnp.int32)

    # Encoder RNN -> hidden at each sequence's last valid timestep (no trajectory).
    h_enc = run_encoder_rnn(xproj_enc, lengths_b1,
                            params["enc_w_hh"].T.astype(jnp.bfloat16))

    # mean / logv / z (reparameterization with externally supplied eps) and
    # latent2hidden, fused in one pallas_call.
    # NOTE: eps is consumed in sorted-batch order (iid noise -> equivalent).
    mean, logv, z, hidden_dec = run_latent_dense(
        h_enc,
        params["h2m_w"].T, params["h2m_b"].reshape(1, L),
        params["h2v_w"].T, params["h2v_b"].reshape(1, L),
        eps,
        params["l2h_w"].T, params["l2h_b"].reshape(1, H))

    # word_dropout_rate == 0 and embedding Dropout p == 0 -> decoder reuses emb.
    # TODO(synk): word dropout / embedding dropout branches (stochastic, rate 0 here).
    out_dec = run_decoder_rnn(xproj_dec, lengths_b1,
                              params["dec_w_hh"].T.astype(jnp.bfloat16),
                              hidden_dec)                            # [S,B,H] bf16

    # [S, B, H] -> [B, S, H], unsort batch to original order (done on the narrow
    # H-wide tensor, before the V-wide projection).
    padded_outputs = jnp.transpose(out_dec, (1, 0, 2))
    reversed_idx = jnp.argsort(sorted_idx)
    padded_outputs = padded_outputs[reversed_idx]

    # outputs2vocab + log_softmax (row-tiled, bf16 MXU operands, fp32 softmax).
    x = padded_outputs.reshape(B * S, H)
    logp = run_proj_logsoftmax(x, params["o2v_w"].T.astype(jnp.bfloat16),
                               params["o2v_b"].reshape(1, V))
    logp = logp.reshape(B, S, V)

    # NOTE: mean/logv/z are returned in sorted batch order while logp is
    # un-sorted, matching the original timbmg SentenceVAE behavior.
    return logp, mean, logv, z


if __name__ == "__main__":
    vocab_size, embedding_size, hidden_size, latent_size = 128, 32, 32, 16
    B, S = 4, 8

    key = jax.random.PRNGKey(0)
    pk, dk, ek = jax.random.split(key, 3)

    params = init_params(pk, vocab_size, embedding_size, hidden_size, latent_size)
    input_sequence = jax.random.randint(dk, (B, S), 0, vocab_size, dtype=jnp.int32)
    # Distinct lengths, max == S (so pad_packed_sequence's max-length trim is a no-op).
    length = jnp.array([8, 5, 7, 3], dtype=jnp.int32)
    eps = jax.random.normal(ek, (B, latent_size), dtype=jnp.float32)

    logp, mean, logv, z = sentence_vae_forward(params, input_sequence, length, eps)
    jax.block_until_ready((logp, mean, logv, z))

    assert logp.shape == (B, S, vocab_size)
    assert mean.shape == (B, latent_size)
    assert logv.shape == (B, latent_size)
    assert z.shape == (B, latent_size)
    assert jnp.isfinite(logp).all() and jnp.isfinite(z).all()
    print("KERNEL_OK")
</pallas_src>

<mosaic_0001>
module attributes {stable_mosaic.version = 11 : i64} {
  func.func @_input_proj_kernel(%arg0: i32, %arg1: memref<32x32xbf16, #tpu.memory_space<vmem>>, %arg2: memref<32x32xbf16, #tpu.memory_space<vmem>>, %arg3: memref<1x32xf32, #tpu.memory_space<vmem>>, %arg4: memref<32x32xbf16, #tpu.memory_space<vmem>>, %arg5: memref<1x32xf32, #tpu.memory_space<vmem>>, %arg6: memref<32x32xbf16, #tpu.memory_space<vmem>>, %arg7: memref<32x32xbf16, #tpu.memory_space<vmem>>) attributes {dimension_semantics = [#tpu.dimension_semantics<parallel>], iteration_bounds = array<i64: 1>, scalar_prefetch = 0 : i64, scratch_operands = 0 : i64, tpu.core_type = #tpu.core_type<tc>, window_params = [{transform_indices = @transform_0, window_bounds = array<i64: 32, 32>}, {pipeline_mode = #tpu.pipeline_mode<synchronous>, transform_indices = @transform_1, window_bounds = array<i64: 32, 32>}, {pipeline_mode = #tpu.pipeline_mode<synchronous>, transform_indices = @transform_2, window_bounds = array<i64: 1, 32>}, {pipeline_mode = #tpu.pipeline_mode<synchronous>, transform_indices = @transform_3, window_bounds = array<i64: 32, 32>}, {pipeline_mode = #tpu.pipeline_mode<synchronous>, transform_indices = @transform_4, window_bounds = array<i64: 1, 32>}, {transform_indices = @transform_5, window_bounds = array<i64: 32, 32>}, {transform_indices = @transform_6, window_bounds = array<i64: 32, 32>}]} {
    %c0 = arith.constant 0 : index
    %c0_0 = arith.constant 0 : index
    %0 = vector.load %arg1[%c0, %c0_0] : memref<32x32xbf16, #tpu.memory_space<vmem>>, vector<32x32xbf16>
    %c0_1 = arith.constant 0 : index
    %c0_2 = arith.constant 0 : index
    %1 = vector.load %arg2[%c0_1, %c0_2] : memref<32x32xbf16, #tpu.memory_space<vmem>>, vector<32x32xbf16>
    %cst = arith.constant dense<0.000000e+00> : vector<32x32xf32>
    %2 = tpu.matmul %0, %1, %cst {dimension_numbers = #tpu.dot_dimension_numbers<[1], [0], [0], [1], [0, 0, 1, 1], [], []>} : vector<32x32xbf16>, vector<32x32xbf16>, vector<32x32xf32> -> vector<32x32xf32>
    %c0_3 = arith.constant 0 : index
    %c0_4 = arith.constant 0 : index
    %3 = vector.load %arg3[%c0_3, %c0_4] : memref<1x32xf32, #tpu.memory_space<vmem>>, vector<1x32xf32>
    %4 = vector.broadcast %3 : vector<1x32xf32> to vector<32x32xf32>
    %5 = arith.addf %2, %4 : vector<32x32xf32>
    %6 = arith.truncf %5 : vector<32x32xf32> to vector<32x32xbf16>
    %c0_5 = arith.constant 0 : index
    %c0_6 = arith.constant 0 : index
    %7 = vector.load %arg6[%c0_5, %c0_6] : memref<32x32xbf16, #tpu.memory_space<vmem>>, vector<32x32xbf16>
    tpu.vector_store %arg6[%c0_5, %c0_6], %6 {strides = array<i32>} : memref<32x32xbf16, #tpu.memory_space<vmem>>, vector<32x32xbf16>,
    %c0_7 = arith.constant 0 : index
    %c0_8 = arith.constant 0 : index
    %8 = vector.load %arg4[%c0_7, %c0_8] : memref<32x32xbf16, #tpu.memory_space<vmem>>, vector<32x32xbf16>
    %cst_9 = arith.constant dense<0.000000e+00> : vector<32x32xf32>
    %9 = tpu.matmul %0, %8, %cst_9 {dimension_numbers = #tpu.dot_dimension_numbers<[1], [0], [0], [1], [0, 0, 1, 1], [], []>} : vector<32x32xbf16>, vector<32x32xbf16>, vector<32x32xf32> -> vector<32x32xf32>
    %c0_10 = arith.constant 0 : index
    %c0_11 = arith.constant 0 : index
    %10 = vector.load %arg5[%c0_10, %c0_11] : memref<1x32xf32, #tpu.memory_space<vmem>>, vector<1x32xf32>
    %11 = vector.broadcast %10 : vector<1x32xf32> to vector<32x32xf32>
    %12 = arith.addf %9, %11 : vector<32x32xf32>
    %13 = arith.truncf %12 : vector<32x32xf32> to vector<32x32xbf16>
    %c0_12 = arith.constant 0 : index
    %c0_13 = arith.constant 0 : index
    %14 = vector.load %arg7[%c0_12, %c0_13] : memref<32x32xbf16, #tpu.memory_space<vmem>>, vector<32x32xbf16>
    tpu.vector_store %arg7[%c0_12, %c0_13], %13 {strides = array<i32>} : memref<32x32xbf16, #tpu.memory_space<vmem>>, vector<32x32xbf16>,
    return
  }
  func.func @transform_0(%arg0: i32) -> (i32, i32) {
    %c0_i32 = arith.constant 0 : i32
    %c0_i32_0 = arith.constant 0 : i32
    return %arg0, %c0_i32 : i32, i32
  }
  func.func @transform_1(%arg0: i32) -> (i32, i32) {
    %c0_i32 = arith.constant 0 : i32
    %c0_i32_0 = arith.constant 0 : i32
    %c0_i32_1 = arith.constant 0 : i32
    return %c0_i32, %c0_i32_0 : i32, i32
  }
  func.func @transform_2(%arg0: i32) -> (i32, i32) {
    %c0_i32 = arith.constant 0 : i32
    %c0_i32_0 = arith.constant 0 : i32
    %c0_i32_1 = arith.constant 0 : i32
    return %c0_i32, %c0_i32_0 : i32, i32
  }
  func.func @transform_3(%arg0: i32) -> (i32, i32) {
    %c0_i32 = arith.constant 0 : i32
    %c0_i32_0 = arith.constant 0 : i32
    %c0_i32_1 = arith.constant 0 : i32
    return %c0_i32, %c0_i32_0 : i32, i32
  }
  func.func @transform_4(%arg0: i32) -> (i32, i32) {
    %c0_i32 = arith.constant 0 : i32
    %c0_i32_0 = arith.constant 0 : i32
    %c0_i32_1 = arith.constant 0 : i32
    return %c0_i32, %c0_i32_0 : i32, i32
  }
  func.func @transform_5(%arg0: i32) -> (i32, i32) {
    %c0_i32 = arith.constant 0 : i32
    %c0_i32_0 = arith.constant 0 : i32
    return %arg0, %c0_i32 : i32, i32
  }
  func.func @transform_6(%arg0: i32) -> (i32, i32) {
    %c0_i32 = arith.constant 0 : i32
    %c0_i32_0 = arith.constant 0 : i32
    return %arg0, %c0_i32 : i32, i32
  }
}

</mosaic_0001>

<llo_original>
// kernel: tpu_custom_call.1
$region0: #{tpu_custom_call.1}
  #allocation0 [shape = 'u32[]', space=smem, size = 0x4, offset = 0x4, fixed_abs, tag = 'smem constant byte address 0x4 - core index']
  #allocation1 [shape = 'u32[144,128]{1,0:T(1,128)}', space=vmem, size = 0x12000, scoped, tag = 'internal scratch']
  %s0 = inlined_call_operand.hbm [shape: bf16[32,32], index: 0, kind: input, shape index: {}]
  %s1 = inlined_call_operand.hbm [shape: bf16[32,32], index: 1, kind: input, shape index: {}]
  %s2 = inlined_call_operand.vmem [shape: f32[1,32], index: 2, kind: input, shape index: {}]
  %s3 = inlined_call_operand.hbm [shape: bf16[32,32], index: 3, kind: input, shape index: {}]
  %s4 = inlined_call_operand.vmem [shape: f32[1,32], index: 4, kind: input, shape index: {}]
  %s5 = inlined_call_operand.hbm [shape: bf16[32,32], index: 5, kind: output, shape index: {0}]
  %s6 = inlined_call_operand.hbm [shape: bf16[32,32], index: 6, kind: output, shape index: {1}]
  %7 = xla_tuple %s5, %s6
  %s8 = sld [smem:[#allocation0]]
  $region50: #{tpu_custom_call.1} parent=0
    _
  %s10 = ssub.s32 1, %s8
  %s11 = scalar_select 0, %s10, %s8
  $region1: #{tpu_custom_call.1} parent=0
    #allocation2 [shape = 'u8[8192]{0}', space=vmem, size = 0x2000, scoped, tag = 'input window, operand 0, single buffered']
    #allocation3 [shape = 's32[1]{0}', space=sflag, size = 0x4, scoped, tag = 'scoped memory for tpu_custom_call.1']
    #allocation4 [shape = 's32[1]{0}', space=sflag, size = 0x4, scoped, tag = 'scoped memory for tpu_custom_call.1']
    #allocation5 [shape = 'u8[8192]{0}', space=vmem, size = 0x2000, scoped, tag = 'input window, operand 1, single buffered']
    #allocation6 [shape = 's32[1]{0}', space=sflag, size = 0x4, scoped, tag = 'scoped memory for tpu_custom_call.1']
    #allocation7 [shape = 'u8[8192]{0}', space=vmem, size = 0x2000, scoped, tag = 'input window, operand 3, single buffered']
    #allocation8 [shape = 'u8[8192]{0}', space=vmem, size = 0x2000, scoped, tag = 'output window, operand 0, single buffered']
    #allocation9 [shape = 'u8[8192]{0}', space=vmem, size = 0x2000, scoped, tag = 'output window, operand 1, single buffered']
    #allocation10 [shape = 's32[1]{0}', space=sflag, size = 0x4, scoped, tag = 'scoped memory for tpu_custom_call.1']
    %12 = vsyncpa [#allocation3], 0
    %13 = vsyncpa [#allocation6], 0
    %14 = vsyncpa [#allocation4], 0
    %15 = vsyncpa [#allocation10], 0
    // Predicated region
    $region2: #{tpu_custom_call.1} parent=1 // pred_check
      _
    $region3: #{tpu_custom_call.1} parent=1 // pred_check_branch
      %17 = sbr.rel (0) target = $region5
    $region4: #{tpu_custom_call.1} parent=1 // pred_region
      %s19 = ssub.s32 256, 256
      %20 = vsyncadd [#allocation3], %s19
      %s21 = sshll.u32 [#allocation2], 4
      %s22 = int_to_ptr.vmem [resolvable:$true] %s21
      %27 = dma.hbm_to_vmem [thread:$0]  %s0, 256, %s22, [#allocation3], 64, 64, 4
    $region5: #{tpu_custom_call.1} parent=1 // pred_fallthru
      _
    // Predicated region
    $region6: #{tpu_custom_call.1} parent=1 // pred_check
      _
    $region7: #{tpu_custom_call.1} parent=1 // pred_check_branch
      %29 = sbr.rel (0) target = $region9
    $region8: #{tpu_custom_call.1} parent=1 // pred_region
      %s31 = ssub.s32 256, 256
      %32 = vsyncadd [#allocation6], %s31
      %s33 = sshll.u32 [#allocation5], 4
      %s34 = int_to_ptr.vmem [resolvable:$true] %s33
      %39 = dma.hbm_to_vmem [thread:$0]  %s1, 256, %s34, [#allocation6], 64, 64, 4
    $region9: #{tpu_custom_call.1} parent=1 // pred_fallthru
      _
    // Predicated region
    $region10: #{tpu_custom_call.1} parent=1 // pred_check
      _
    $region11: #{tpu_custom_call.1} parent=1 // pred_check_branch
      %41 = sbr.rel (0) target = $region13
    $region12: #{tpu_custom_call.1} parent=1 // pred_region
      _
    $region13: #{tpu_custom_call.1} parent=1 // pred_fallthru
      _
    // Predicated region
    $region14: #{tpu_custom_call.1} parent=1 // pred_check
      _
    $region15: #{tpu_custom_call.1} parent=1 // pred_check_branch
      %43 = sbr.rel (0) target = $region17
    $region16: #{tpu_custom_call.1} parent=1 // pred_region
      %s45 = ssub.s32 256, 256
      %46 = vsyncadd [#allocation6], %s45
      %s47 = sshll.u32 [#allocation7], 4
      %s48 = int_to_ptr.vmem [resolvable:$true] %s47
      %53 = dma.hbm_to_vmem [thread:$0]  %s3, 256, %s48, [#allocation6], 64, 64, 4
    $region17: #{tpu_custom_call.1} parent=1 // pred_fallthru
      _
    // Predicated region
    $region18: #{tpu_custom_call.1} parent=1 // pred_check
      _
    $region19: #{tpu_custom_call.1} parent=1 // pred_check_branch
      %55 = sbr.rel (0) target = $region21
    $region20: #{tpu_custom_call.1} parent=1 // pred_region
      _
    $region21: #{tpu_custom_call.1} parent=1 // pred_fallthru
      _
    // Predicated region
    $region22: #{tpu_custom_call.1} parent=1 // pred_check
      _
    $region23: #{tpu_custom_call.1} parent=1 // pred_check_branch
      %57 = sbr.rel (0) target = $region25
    $region24: #{tpu_custom_call.1} parent=1 // pred_region
      %58 = dma.done [#allocation3], 256
    $region25: #{tpu_custom_call.1} parent=1 // pred_fallthru
      _
    // Predicated region
    $region26: #{tpu_custom_call.1} parent=1 // pred_check
      _
    $region27: #{tpu_custom_call.1} parent=1 // pred_check_branch
      %60 = sbr.rel (0) target = $region29
    $region28: #{tpu_custom_call.1} parent=1 // pred_region
      %61 = dma.done [#allocation6], 256
    $region29: #{tpu_custom_call.1} parent=1 // pred_fallthru
      _
    // Predicated region
    $region30: #{tpu_custom_call.1} parent=1 // pred_check
      _
    $region31: #{tpu_custom_call.1} parent=1 // pred_check_branch
      %63 = sbr.rel (0) target = $region33
    $region32: #{tpu_custom_call.1} parent=1 // pred_region
      %64 = dma.done [#allocation6], 256
    $region33: #{tpu_custom_call.1} parent=1 // pred_fallthru
      _
    %v66 = vld [vmem:[#allocation2] sm:$0xf]
    %v67 = vld [vmem:[#allocation2 + $0x4] sm:$0xf]
    %v68 = vld [vmem:[#allocation2 + $0x8] sm:$0xf]
    %v69 = vld [vmem:[#allocation2 + $0xc] sm:$0xf]
    %v70 = vld [vmem:[#allocation5] sm:$0xf]
    %v71 = vld [vmem:[#allocation5 + $0x4] sm:$0xf]
    %v72 = vld [vmem:[#allocation5 + $0x8] sm:$0xf]
    %v73 = vld [vmem:[#allocation5 + $0xc] sm:$0xf]
    %v74 = vld [vmem:[%s2] sm:$0x1]
    %v76 = vlaneseq
    %v77 = vshrl.u32 %v76, 7
    %v78 = vsub.s32 0, %v77
    %v79 = vrot.slane %v74, %v78
    %v85 = vunpack.c.l.b16 %v66
    %v86 = vunpack.c.l.b16 %v67
    %v87 = vunpack.c.l.b16 %v68
    %v88 = vunpack.c.l.b16 %v69
    %v89 = vpack.c.b16 %v86, %v85
    %v90 = vpack.c.b16 %v88, %v87
    %v95 = vunpack.c.l.b16 %v70
    %v96 = vunpack.c.l.b16 %v71
    %v97 = vunpack.c.l.b16 %v72
    %v98 = vunpack.c.l.b16 %v73
    %v99 = vpack.c.b16 %v96, %v95
    %v100 = vpack.c.b16 %v98, %v97
    %vm103 = vcmask 261120
    %v105 = vsel %vm103, %v89, 0
    %v108 = vsel %vm103, %v90, 0
    %110 = vmatprep.subr.bf16.mxu0 0
    %111 = vmatpush1.bf16.msra.mxu0 %v99
    %112 = vmatprep.subr.bf16.mxu0 0
    %113 = vmatpush1.bf16.msra.mxu0 %v100
    %114 = vmatprep.subr.bf16.mxu0 0
    %115 = vmatpush1.bf16.msra.mxu0 0
    %116 = vmatprep.subr.bf16.mxu0 0
    %117 = vmatpush1.bf16.msra.mxu0 0
    %118 = vmatprep.subr.bf16.mxu0 0
    %119 = vmatpush1.bf16.msra.mxu0 0
    %120 = vmatprep.subr.bf16.mxu0 0
    %121 = vmatpush1.bf16.msra.mxu0 0
    %122 = vmatprep.subr.bf16.mxu0 0
    %123 = vmatpush1.bf16.msra.mxu0 0
    %124 = vmatprep.subr.bf16.mxu0 0
    %125 = vmatpush1.bf16.msra.mxu0 0
    %126 = vmatprep.subr.bf16.mxu0 0
    %127 = vmatpush1.bf16.msra.mxu0 0
    %128 = vmatprep.subr.bf16.mxu0 0
    %129 = vmatpush1.bf16.msra.mxu0 0
    %130 = vmatprep.subr.bf16.mxu0 0
    %131 = vmatpush1.bf16.msra.mxu0 0
    %132 = vmatprep.subr.bf16.mxu0 0
    %133 = vmatpush1.bf16.msra.mxu0 0
    %134 = vmatprep.subr.bf16.mxu0 0
    %135 = vmatpush1.bf16.msra.mxu0 0
    %136 = vmatprep.subr.bf16.mxu0 0
    %137 = vmatpush1.bf16.msra.mxu0 0
    %138 = vmatprep.subr.bf16.mxu0 0
    %139 = vmatpush1.bf16.msra.mxu0 0
    %140 = vmatprep.subr.bf16.mxu0 0
    %141 = vmatpush1.bf16.msra.mxu0 0
    %142 = vmatprep.mubr.bf16.mxu0 0
    %143 = vmatmul.mubr.bf16.gmra.mrb[0].mxu0 %v105
    %v144 = vpop.f32.mrb[0].mxu0
    %v145 = vadd.f32 %v79, %v144
    %v146 = vpop.f32.mrb[0].mxu0
    %v147 = vpop.f32.mrb[0].mxu0
    %v148 = vadd.f32 %v79, %v147
    %v149 = vpop.f32.mrb[0].mxu0
    %150 = vmatprep.mubr.bf16.mxu0 0
    %151 = vmatmul.mubr.bf16.gmra.mrb[0].mxu0 %v108
    %v152 = vpop.f32.mrb[0].mxu0
    %v153 = vadd.f32 %v79, %v152
    %v154 = vpop.f32.mrb[0].mxu0
    %v155 = vpop.f32.mrb[0].mxu0
    %v156 = vadd.f32 %v79, %v155
    %v157 = vpop.f32.mrb[0].mxu0
    %158 = vdwg.mxu0
    %v159 = vpack.c.bf16 %v148, %v145
    %v160 = vpack.c.bf16 %v156, %v153
    %v163 = vunpack.c.l.b16 %v159
    %v164 = vunpack.c.h.b16 %v159
    %v165 = vunpack.c.l.b16 %v160
    %v166 = vunpack.c.h.b16 %v160
    %v167 = vpack.c.b16 %v163, %v163
    %v168 = vpack.c.b16 %v164, %v164
    %v169 = vpack.c.b16 %v165, %v165
    %v170 = vpack.c.b16 %v166, %v166
    %vm175 = vcmask 257024
    %176 = vst.msk [vmem:[#allocation8] sm:$0xf] %vm175, %v167
    %177 = vst.msk [vmem:[#allocation8 + $0x4] sm:$0xf] %vm175, %v168
    %178 = vst.msk [vmem:[#allocation8 + $0x8] sm:$0xf] %vm175, %v169
    %179 = vst.msk [vmem:[#allocation8 + $0xc] sm:$0xf] %vm175, %v170
    %v180 = vld [vmem:[#allocation7] sm:$0xf]
    %v181 = vld [vmem:[#allocation7 + $0x4] sm:$0xf]
    %v182 = vld [vmem:[#allocation7 + $0x8] sm:$0xf]
    %v183 = vld [vmem:[#allocation7 + $0xc] sm:$0xf]
    %v184 = vld [vmem:[%s4] sm:$0x1]
    %v186 = vlaneseq
    %v187 = vshrl.u32 %v186, 7
    %v188 = vsub.s32 0, %v187
    %v189 = vrot.slane %v184, %v188
    %v195 = vunpack.c.l.b16 %v180
    %v196 = vunpack.c.l.b16 %v181
    %v197 = vunpack.c.l.b16 %v182
    %v198 = vunpack.c.l.b16 %v183
    %v199 = vpack.c.b16 %v196, %v195
    %v200 = vpack.c.b16 %v198, %v197
    %203 = vmatprep.subr.bf16.mxu0 0
    %204 = vmatpush1.bf16.msra.mxu0 %v199
    %205 = vmatprep.subr.bf16.mxu0 0
    %206 = vmatpush1.bf16.msra.mxu0 %v200
    %207 = vmatprep.subr.bf16.mxu0 0
    %208 = vmatpush1.bf16.msra.mxu0 0
    %209 = vmatprep.subr.bf16.mxu0 0
    %210 = vmatpush1.bf16.msra.mxu0 0
    %211 = vmatprep.subr.bf16.mxu0 0
    %212 = vmatpush1.bf16.msra.mxu0 0
    %213 = vmatprep.subr.bf16.mxu0 0
    %214 = vmatpush1.bf16.msra.mxu0 0
    %215 = vmatprep.subr.bf16.mxu0 0
    %216 = vmatpush1.bf16.msra.mxu0 0
    %217 = vmatprep.subr.bf16.mxu0 0
    %218 = vmatpush1.bf16.msra.mxu0 0
    %219 = vmatprep.subr.bf16.mxu0 0
    %220 = vmatpush1.bf16.msra.mxu0 0
    %221 = vmatprep.subr.bf16.mxu0 0
    %222 = vmatpush1.bf16.msra.mxu0 0
    %223 = vmatprep.subr.bf16.mxu0 0
    %224 = vmatpush1.bf16.msra.mxu0 0
    %225 = vmatprep.subr.bf16.mxu0 0
    %226 = vmatpush1.bf16.msra.mxu0 0
    %227 = vmatprep.subr.bf16.mxu0 0
    %228 = vmatpush1.bf16.msra.mxu0 0
    %229 = vmatprep.subr.bf16.mxu0 0
    %230 = vmatpush1.bf16.msra.mxu0 0
    %231 = vmatprep.subr.bf16.mxu0 0
    %232 = vmatpush1.bf16.msra.mxu0 0
    %233 = vmatprep.subr.bf16.mxu0 0
    %234 = vmatpush1.bf16.msra.mxu0 0
    %235 = vmatprep.mubr.bf16.mxu0 0
    %236 = vmatmul.mubr.bf16.gmra.mrb[0].mxu0 %v105
    %v237 = vpop.f32.mrb[0].mxu0
    %v238 = vadd.f32 %v189, %v237
    %v239 = vpop.f32.mrb[0].mxu0
    %v240 = vpop.f32.mrb[0].mxu0
    %v241 = vadd.f32 %v189, %v240
    %v242 = vpop.f32.mrb[0].mxu0
    %243 = vmatprep.mubr.bf16.mxu0 0
    %244 = vmatmul.mubr.bf16.gmra.mrb[0].mxu0 %v108
    %v245 = vpop.f32.mrb[0].mxu0
    %v246 = vadd.f32 %v189, %v245
    %v247 = vpop.f32.mrb[0].mxu0
    %v248 = vpop.f32.mrb[0].mxu0
    %v249 = vadd.f32 %v189, %v248
    %v250 = vpop.f32.mrb[0].mxu0
    %251 = vdwg.mxu0
    %v252 = vpack.c.bf16 %v241, %v238
    %v253 = vpack.c.bf16 %v249, %v246
    %v256 = vunpack.c.l.b16 %v252
    %v257 = vunpack.c.h.b16 %v252
    %v258 = vunpack.c.l.b16 %v253
    %v259 = vunpack.c.h.b16 %v253
    %v260 = vpack.c.b16 %v256, %v256
    %v261 = vpack.c.b16 %v257, %v257
    %v262 = vpack.c.b16 %v258, %v258
    %v263 = vpack.c.b16 %v259, %v259
    %268 = vst.msk [vmem:[#allocation9] sm:$0xf] %vm175, %v260
    %269 = vst.msk [vmem:[#allocation9 + $0x4] sm:$0xf] %vm175, %v261
    %270 = vst.msk [vmem:[#allocation9 + $0x8] sm:$0xf] %vm175, %v262
    %271 = vst.msk [vmem:[#allocation9 + $0xc] sm:$0xf] %vm175, %v263
    // Predicated region
    $region34: #{tpu_custom_call.1} parent=1 // pred_check
      _
    $region35: #{tpu_custom_call.1} parent=1 // pred_check_branch
      %273 = sbr.rel (0) target = $region37
    $region36: #{tpu_custom_call.1} parent=1 // pred_region
      %s275 = ssub.s32 256, 256
      %276 = vsyncadd [#allocation4], %s275
      %s277 = sshll.u32 [#allocation8], 4
      %s278 = int_to_ptr.vmem [resolvable:$true] %s277
      %283 = dma.vmem_to_hbm [thread:$0]  %s278, 256, %s5, [#allocation4], 64, 64, 4
    $region37: #{tpu_custom_call.1} parent=1 // pred_fallthru
      _
    // Predicated region
    $region38: #{tpu_custom_call.1} parent=1 // pred_check
      _
    $region39: #{tpu_custom_call.1} parent=1 // pred_check_branch
      %285 = sbr.rel (0) target = $region41
    $region40: #{tpu_custom_call.1} parent=1 // pred_region
      %s287 = ssub.s32 256, 256
      %288 = vsyncadd [#allocation10], %s287
      %s289 = sshll.u32 [#allocation9], 4
      %s290 = int_to_ptr.vmem [resolvable:$true] %s289
      %295 = dma.vmem_to_hbm [thread:$0]  %s290, 256, %s6, [#allocation10], 64, 64, 4
    $region41: #{tpu_custom_call.1} parent=1 // pred_fallthru
      _
    // Predicated region
    $region42: #{tpu_custom_call.1} parent=1 // pred_check
      _
    $region43: #{tpu_custom_call.1} parent=1 // pred_check_branch
      %297 = sbr.rel (0) target = $region45
    $region44: #{tpu_custom_call.1} parent=1 // pred_region
      %298 = dma.done [#allocation4], 256
    $region45: #{tpu_custom_call.1} parent=1 // pred_fallthru
      _
    // Predicated region
    $region46: #{tpu_custom_call.1} parent=1 // pred_check
      _
    $region47: #{tpu_custom_call.1} parent=1 // pred_check_branch
      %300 = sbr.rel (0) target = $region49
    $region48: #{tpu_custom_call.1} parent=1 // pred_region
      %301 = dma.done [#allocation10], 256
    $region49: #{tpu_custom_call.1} parent=1 // pred_fallthru
      _
    %302 = vsyncpa [#allocation3], 1
    %303 = vsyncpa [#allocation6], 1
    %304 = vsyncpa [#allocation4], 1
    %305 = vsyncpa [#allocation10], 1

</llo_original>
